<compile_context>
chip_gen: v7x
topology: tpu7x:2x2x1
jax: 0.10.0
libtpu: 0.0.40
codegen_flags: <defaults>
</compile_context>

<pallas_src>
import jax
import jax.numpy as jnp
from jax.experimental import pallas as pl
from jax.experimental.pallas import tpu as pltpu


# ----------------------------------------------------------------------------
# Fused inner-model + CFG kernel.  One grid step = one HW tile, whole batch.
# All tensors are (rows, THW) so the spatial axis stays on the 128-wide lane axis.
# ----------------------------------------------------------------------------
def _cfg_kernel(cinx_ref, cinl_ref, scale_ref,            # SMEM scalars
                x_ref, lr_ref, emb_u_ref, emb_c_ref,      # VMEM blocks
                w1x_ref, w1l_ref, w2_ref, b2_ref,         # grid-resident weights (transposed)
                o_ref):
    B = x_ref.shape[0]
    s = scale_ref[0]
    w1x = w1x_ref[...]            # (hidden, C)  f32
    w1l = w1l_ref[...]            # (hidden, C)
    w2 = w2_ref[...]              # (C, hidden)
    b2 = b2_ref[...]              # (C, 1)

    @pl.loop(0, B, unroll=True)
    def _(b):
        # c_in scaling folded onto the tiny (hidden, C) weights (O(hidden*C)) instead
        # of the (C, THW) activations -> removes two full VPU passes per tile.
        w1x_b = w1x * cinx_ref[b]
        w1l_b = w1l * cinl_ref[b]

        xb = x_ref[b].astype(jnp.float32)     # bf16 -> f32 load-convert, f32 math after
        lb = lr_ref[b].astype(jnp.float32)

        # First layer: shared between the uncond and cond passes (computed once).
        pre = (jnp.dot(w1x_b, xb, preferred_element_type=jnp.float32)
               + jnp.dot(w1l_b, lb, preferred_element_type=jnp.float32))   # (hidden, THW)

        h_u = jnp.maximum(pre + emb_u_ref[b], 0.0)   # (hidden, THW)
        h_c = jnp.maximum(pre + emb_c_ref[b], 0.0)

        # CFG combine folded through the linear second layer -> single matmul.
        h = h_u + (h_c - h_u) * s
        out = jnp.dot(w2, h, preferred_element_type=jnp.float32) + b2       # (C, THW)
        o_ref[b] = out.astype(o_ref.dtype)


def _pick_hw_tile(hw, target=16384):
    """Largest multiple-of-128 divisor of hw that is <= target (or hw itself)."""
    if hw <= target:
        return hw
    t = (target // 128) * 128
    while t >= 128:
        if hw % t == 0:
            return t
        t -= 128
    # TODO(synk): non-128-divisible HW falls back to a single (possibly large) tile.
    return hw


# ----------------------------------------------------------------------------
# CFGUpscaler.forward
# ----------------------------------------------------------------------------
def cfg_upscaler_forward(params, uc, cond_scale, x, sigma, low_res, low_res_sigma, c,
                         act_dtype=jnp.bfloat16):
    B, C, H, W = x.shape
    HW = H * W
    hidden = params["w1x"].shape[1]

    thw = _pick_hw_tile(HW)
    n_tiles = HW // thw

    # Free reshapes (NCHW -> (B, C, HW)); cast activations to bf16 (HBM-bound kernel).
    x_r = x.reshape(B, C, HW).astype(act_dtype)
    lr_r = low_res.reshape(B, C, HW).astype(act_dtype)

    # Per-batch input scalings hoisted out of the kernel (tiny XLA ops -> SMEM scalars).
    cinx = (1.0 / jnp.sqrt(sigma.astype(jnp.float32) ** 2 + 1.0))              # (B,)
    cinl = (1.0 / jnp.sqrt(low_res_sigma.astype(jnp.float32) ** 2 + 1.0))      # (B,)

    # Hoisted conditioning embedding (+ b1): tiny (B,D)x(D,hidden) XLA matmul.
    emb_c = (c[0] @ params["wc"] + params["b1"])[..., None]    # (B, hidden, 1)
    emb_u = (uc[0] @ params["wc"] + params["b1"])[..., None]   # (B, hidden, 1)

    # NOTE: mirrors the PyTorch module; requires a static Python float cond_scale.
    if cond_scale in (0.0, 1.0):
        emb_sel = emb_u if cond_scale == 0.0 else emb_c
        emb_u_in, emb_c_in, scale_val = emb_sel, emb_sel, 0.0   # reduces to one pass exactly
    else:
        emb_u_in, emb_c_in, scale_val = emb_u, emb_c, float(cond_scale)

    # Weights in transposed orientation so HW stays on the lane axis.
    w1x_t = params["w1x"].T        # (hidden, C)
    w1l_t = params["w1l"].T        # (hidden, C)
    w2_t = params["w2"].T          # (C, hidden)
    b2_t = params["b2"].T          # (C, 1)

    out = pl.pallas_call(
        _cfg_kernel,
        out_shape=jax.ShapeDtypeStruct((B, C, HW), jnp.float32),
        grid=(n_tiles,),
        in_specs=[
            pl.BlockSpec(memory_space=pltpu.SMEM),                 # c_in_x      (B,)
            pl.BlockSpec(memory_space=pltpu.SMEM),                 # c_in_lr     (B,)
            pl.BlockSpec(memory_space=pltpu.SMEM),                 # cond_scale  (1,)
            pl.BlockSpec((B, C, thw), lambda t: (0, 0, t)),        # x       (HW-tiled)
            pl.BlockSpec((B, C, thw), lambda t: (0, 0, t)),        # low_res (HW-tiled)
            pl.BlockSpec((B, hidden, 1), lambda t: (0, 0, 0)),     # emb_u   (resident)
            pl.BlockSpec((B, hidden, 1), lambda t: (0, 0, 0)),     # emb_c   (resident)
            pl.BlockSpec((hidden, C), lambda t: (0, 0)),           # w1x^T   (resident)
            pl.BlockSpec((hidden, C), lambda t: (0, 0)),           # w1l^T   (resident)
            pl.BlockSpec((C, hidden), lambda t: (0, 0)),           # w2^T    (resident)
            pl.BlockSpec((C, 1), lambda t: (0, 0)),                # b2^T    (resident)
        ],
        out_specs=pl.BlockSpec((B, C, thw), lambda t: (0, 0, t)),
        compiler_params=pltpu.CompilerParams(
            dimension_semantics=("parallel",),          # HW tiles -> both v7x TCs busy
            vmem_limit_bytes=48 * 1024 * 1024,          # headroom, still < v7x physical
        ),
    )(cinx, cinl, jnp.asarray([scale_val], jnp.float32),
      x_r, lr_r,
      emb_u_in.astype(jnp.float32), emb_c_in.astype(jnp.float32),
      w1x_t, w1l_t, w2_t, b2_t)

    return out.reshape(B, C, H, W)


# ----------------------------------------------------------------------------
# Pure-JAX reference (mirrors the PyTorch batch-doubled path; correctness only)
# ----------------------------------------------------------------------------
def inner_model_ref(x, sigma, low_res, low_res_sigma, c_list, params):
    B, C, H, W = x.shape
    cx = (1.0 / jnp.sqrt(sigma ** 2 + 1.0)).reshape(B, 1, 1, 1)
    clr = (1.0 / jnp.sqrt(low_res_sigma ** 2 + 1.0)).reshape(B, 1, 1, 1)
    xs = jnp.transpose(x * cx, (0, 2, 3, 1)).reshape(B, H * W, C)
    ls = jnp.transpose(low_res * clr, (0, 2, 3, 1)).reshape(B, H * W, C)
    emb = c_list[0] @ params["wc"]
    h = xs @ params["w1x"] + ls @ params["w1l"] + params["b1"] + emb[:, None, :]
    h = jnp.maximum(h, 0.0)
    out = h @ params["w2"] + params["b2"]
    return jnp.transpose(out.reshape(B, H, W, C), (0, 3, 1, 2))


def cfg_upscaler_ref(params, uc, cond_scale, x, sigma, low_res, low_res_sigma, c):
    x_in = jnp.concatenate([x, x], axis=0)
    sigma_in = jnp.concatenate([sigma, sigma], axis=0)
    low_res_in = jnp.concatenate([low_res, low_res], axis=0)
    low_res_sigma_in = jnp.concatenate([low_res_sigma, low_res_sigma], axis=0)
    c_in = [jnp.concatenate([uc_i, c_i], axis=0) for uc_i, c_i in zip(uc, c)]
    out = inner_model_ref(x_in, sigma_in, low_res_in, low_res_sigma_in, c_in, params)
    uncond, cond = jnp.split(out, 2, axis=0)
    return uncond + (cond - uncond) * cond_scale


def init_params(key, C, D, hidden):
    k1, k2, k3, k4 = jax.random.split(key, 4)
    return {
        "w1x": jax.random.normal(k1, (C, hidden), jnp.float32) * 0.1,
        "w1l": jax.random.normal(k2, (C, hidden), jnp.float32) * 0.1,
        "b1": jnp.zeros((1, hidden), jnp.float32),
        "wc": jax.random.normal(k3, (D, hidden), jnp.float32) * 0.1,
        "w2": jax.random.normal(k4, (hidden, C), jnp.float32) * 0.1,
        "b2": jnp.zeros((1, C), jnp.float32),
    }


if __name__ == "__main__":
    key = jax.random.PRNGKey(0)
    keys = jax.random.split(key, 6)

    B, C, H, W = 2, 4, 16, 16
    D, hidden = 32, 32
    cond_scale = 7.5   # != {0, 1}: exercises the fused CFG path

    x = jax.random.normal(keys[0], (B, C, H, W), jnp.float32)
    sigma = jnp.abs(jax.random.normal(keys[1], (B,), jnp.float32)) + 0.5
    # NOTE: real upscalers feed a smaller low_res; same spatial kept here for the
    # synthetic inner model — CFG wrapper semantics are unaffected.
    low_res = jax.random.normal(keys[2], (B, C, H, W), jnp.float32)
    low_res_sigma = jnp.abs(jax.random.normal(keys[3], (B,), jnp.float32)) + 0.1
    c = [jax.random.normal(keys[4], (B, D), jnp.float32)]
    uc = [jnp.zeros((B, D), jnp.float32)]

    params = init_params(keys[5], C, D, hidden)

    out = cfg_upscaler_forward(params, uc, cond_scale, x, sigma, low_res,
                               low_res_sigma, c)
    out = jax.block_until_ready(out)

    # Reference on the same bf16-rounded activations (kernel casts x/low_res to bf16
    # for HBM bandwidth; accumulation in both paths is f32).
    x_q = x.astype(jnp.bfloat16).astype(jnp.float32)
    lr_q = low_res.astype(jnp.bfloat16).astype(jnp.float32)
    ref = cfg_upscaler_ref(params, uc, cond_scale, x_q, sigma, lr_q,
                           low_res_sigma, c)

    assert out.shape == (B, C, H, W)
    assert jnp.allclose(out, ref, atol=2e-4, rtol=2e-4), "mismatch vs reference"

    print("KERNEL_OK")
</pallas_src>

<mosaic_0001>
module attributes {stable_mosaic.version = 11 : i64} {
  func.func @_cfg_kernel(%arg0: i32, %arg1: memref<2xf32, #tpu.memory_space<smem>>, %arg2: memref<2xf32, #tpu.memory_space<smem>>, %arg3: memref<1xf32, #tpu.memory_space<smem>>, %arg4: memref<2x4x256xbf16, #tpu.memory_space<vmem>>, %arg5: memref<2x4x256xbf16, #tpu.memory_space<vmem>>, %arg6: memref<2x32x1xf32, #tpu.memory_space<vmem>>, %arg7: memref<2x32x1xf32, #tpu.memory_space<vmem>>, %arg8: memref<32x4xf32, #tpu.memory_space<vmem>>, %arg9: memref<32x4xf32, #tpu.memory_space<vmem>>, %arg10: memref<4x32xf32, #tpu.memory_space<vmem>>, %arg11: memref<4x1xf32, #tpu.memory_space<vmem>>, %arg12: memref<2x4x256xf32, #tpu.memory_space<vmem>>) attributes {dimension_semantics = [#tpu.dimension_semantics<parallel>], iteration_bounds = array<i64: 1>, scalar_prefetch = 0 : i64, scratch_operands = 0 : i64, tpu.core_type = #tpu.core_type<tc>, window_params = [{transform_indices = @transform_0, window_bounds = array<i64: 2>}, {transform_indices = @transform_1, window_bounds = array<i64: 2>}, {transform_indices = @transform_2, window_bounds = array<i64: 1>}, {transform_indices = @transform_3, window_bounds = array<i64: 2, 4, 256>}, {transform_indices = @transform_4, window_bounds = array<i64: 2, 4, 256>}, {pipeline_mode = #tpu.pipeline_mode<synchronous>, transform_indices = @transform_5, window_bounds = array<i64: 2, 32, 1>}, {pipeline_mode = #tpu.pipeline_mode<synchronous>, transform_indices = @transform_6, window_bounds = array<i64: 2, 32, 1>}, {pipeline_mode = #tpu.pipeline_mode<synchronous>, transform_indices = @transform_7, window_bounds = array<i64: 32, 4>}, {pipeline_mode = #tpu.pipeline_mode<synchronous>, transform_indices = @transform_8, window_bounds = array<i64: 32, 4>}, {pipeline_mode = #tpu.pipeline_mode<synchronous>, transform_indices = @transform_9, window_bounds = array<i64: 4, 32>}, {pipeline_mode = #tpu.pipeline_mode<synchronous>, transform_indices = @transform_10, window_bounds = array<i64: 4, 1>}, {transform_indices = @transform_11, window_bounds = array<i64: 2, 4, 256>}]} {
    %c0 = arith.constant 0 : index
    %0 = memref.load %arg3[%c0] : memref<1xf32, #tpu.memory_space<smem>>
    %c0_0 = arith.constant 0 : index
    %c0_1 = arith.constant 0 : index
    %1 = vector.load %arg8[%c0_0, %c0_1] : memref<32x4xf32, #tpu.memory_space<vmem>>, vector<32x4xf32>
    %c0_2 = arith.constant 0 : index
    %c0_3 = arith.constant 0 : index
    %2 = vector.load %arg9[%c0_2, %c0_3] : memref<32x4xf32, #tpu.memory_space<vmem>>, vector<32x4xf32>
    %c0_4 = arith.constant 0 : index
    %c0_5 = arith.constant 0 : index
    %3 = vector.load %arg10[%c0_4, %c0_5] : memref<4x32xf32, #tpu.memory_space<vmem>>, vector<4x32xf32>
    %c0_6 = arith.constant 0 : index
    %c0_7 = arith.constant 0 : index
    %4 = vector.load %arg11[%c0_6, %c0_7] : memref<4x1xf32, #tpu.memory_space<vmem>>, vector<4x1xf32>
    %c0_i32 = arith.constant 0 : i32
    %c1_i32 = arith.constant 1 : i32
    %5 = arith.muli %c0_i32, %c1_i32 : i32
    %c0_i32_8 = arith.constant 0 : i32
    %6 = arith.addi %c0_i32_8, %5 : i32
    %7 = arith.index_cast %6 : i32 to index
    %8 = memref.load %arg1[%7] : memref<2xf32, #tpu.memory_space<smem>>
    %9 = vector.broadcast %8 : f32 to vector<32x4xf32>
    %10 = arith.mulf %1, %9 : vector<32x4xf32>
    %11 = arith.index_cast %6 : i32 to index
    %12 = memref.load %arg2[%11] : memref<2xf32, #tpu.memory_space<smem>>
    %13 = vector.broadcast %12 : f32 to vector<32x4xf32>
    %14 = arith.mulf %2, %13 : vector<32x4xf32>
    %15 = arith.index_cast %6 : i32 to index
    %c0_9 = arith.constant 0 : index
    %c0_10 = arith.constant 0 : index
    %16 = vector.load %arg4[%15, %c0_9, %c0_10] : memref<2x4x256xbf16, #tpu.memory_space<vmem>>, vector<1x4x256xbf16>
    %17 = vector.shape_cast %16 : vector<1x4x256xbf16> to vector<4x256xbf16>
    %18 = arith.extf %17 : vector<4x256xbf16> to vector<4x256xf32>
    %19 = arith.index_cast %6 : i32 to index
    %c0_11 = arith.constant 0 : index
    %c0_12 = arith.constant 0 : index
    %20 = vector.load %arg5[%19, %c0_11, %c0_12] : memref<2x4x256xbf16, #tpu.memory_space<vmem>>, vector<1x4x256xbf16>
    %21 = vector.shape_cast %20 : vector<1x4x256xbf16> to vector<4x256xbf16>
    %22 = arith.extf %21 : vector<4x256xbf16> to vector<4x256xf32>
    %cst = arith.constant dense<0.000000e+00> : vector<32x256xf32>
    %23 = tpu.matmul %10, %18, %cst {dimension_numbers = #tpu.dot_dimension_numbers<[1], [0], [0], [1], [0, 0, 1, 1], [], []>} : vector<32x4xf32>, vector<4x256xf32>, vector<32x256xf32> -> vector<32x256xf32>
    %cst_13 = arith.constant dense<0.000000e+00> : vector<32x256xf32>
    %24 = tpu.matmul %14, %22, %cst_13 {dimension_numbers = #tpu.dot_dimension_numbers<[1], [0], [0], [1], [0, 0, 1, 1], [], []>} : vector<32x4xf32>, vector<4x256xf32>, vector<32x256xf32> -> vector<32x256xf32>
    %25 = arith.addf %23, %24 : vector<32x256xf32>
    %26 = arith.index_cast %6 : i32 to index
    %c0_14 = arith.constant 0 : index
    %c0_15 = arith.constant 0 : index
    %27 = vector.load %arg6[%26, %c0_14, %c0_15] : memref<2x32x1xf32, #tpu.memory_space<vmem>>, vector<1x32x1xf32>
    %28 = vector.shape_cast %27 : vector<1x32x1xf32> to vector<32x1xf32>
    %29 = vector.broadcast %28 : vector<32x1xf32> to vector<32x256xf32>
    %30 = arith.addf %25, %29 : vector<32x256xf32>
    %cst_16 = arith.constant 0.000000e+00 : f32
    %31 = vector.broadcast %cst_16 : f32 to vector<32x256xf32>
    %32 = arith.maximumf %30, %31 : vector<32x256xf32>
    %33 = arith.index_cast %6 : i32 to index
    %c0_17 = arith.constant 0 : index
    %c0_18 = arith.constant 0 : index
    %34 = vector.load %arg7[%33, %c0_17, %c0_18] : memref<2x32x1xf32, #tpu.memory_space<vmem>>, vector<1x32x1xf32>
    %35 = vector.shape_cast %34 : vector<1x32x1xf32> to vector<32x1xf32>
    %36 = vector.broadcast %35 : vector<32x1xf32> to vector<32x256xf32>
    %37 = arith.addf %25, %36 : vector<32x256xf32>
    %cst_19 = arith.constant 0.000000e+00 : f32
    %38 = vector.broadcast %cst_19 : f32 to vector<32x256xf32>
    %39 = arith.maximumf %37, %38 : vector<32x256xf32>
    %40 = arith.subf %39, %32 : vector<32x256xf32>
    %41 = vector.broadcast %0 : f32 to vector<32x256xf32>
    %42 = arith.mulf %40, %41 : vector<32x256xf32>
    %43 = arith.addf %32, %42 : vector<32x256xf32>
    %cst_20 = arith.constant dense<0.000000e+00> : vector<4x256xf32>
    %44 = tpu.matmul %3, %43, %cst_20 {dimension_numbers = #tpu.dot_dimension_numbers<[1], [0], [0], [1], [0, 0, 1, 1], [], []>} : vector<4x32xf32>, vector<32x256xf32>, vector<4x256xf32> -> vector<4x256xf32>
    %45 = vector.broadcast %4 : vector<4x1xf32> to vector<4x256xf32>
    %46 = arith.addf %44, %45 : vector<4x256xf32>
    %47 = arith.index_cast %6 : i32 to index
    %c0_21 = arith.constant 0 : index
    %c0_22 = arith.constant 0 : index
    %48 = vector.load %arg12[%47, %c0_21, %c0_22] : memref<2x4x256xf32, #tpu.memory_space<vmem>>, vector<1x4x256xf32>
    %49 = vector.shape_cast %48 : vector<1x4x256xf32> to vector<4x256xf32>
    %50 = vector.shape_cast %46 : vector<4x256xf32> to vector<1x4x256xf32>
    tpu.vector_store %arg12[%47, %c0_21, %c0_22], %50 {strides = array<i32>} : memref<2x4x256xf32, #tpu.memory_space<vmem>>, vector<1x4x256xf32>,
    %c1_i32_23 = arith.constant 1 : i32
    %c1_i32_24 = arith.constant 1 : i32
    %51 = arith.muli %c1_i32_23, %c1_i32_24 : i32
    %c0_i32_25 = arith.constant 0 : i32
    %52 = arith.addi %c0_i32_25, %51 : i32
    %53 = arith.index_cast %52 : i32 to index
    %54 = memref.load %arg1[%53] : memref<2xf32, #tpu.memory_space<smem>>
    %55 = vector.broadcast %54 : f32 to vector<32x4xf32>
    %56 = arith.mulf %1, %55 : vector<32x4xf32>
    %57 = arith.index_cast %52 : i32 to index
    %58 = memref.load %arg2[%57] : memref<2xf32, #tpu.memory_space<smem>>
    %59 = vector.broadcast %58 : f32 to vector<32x4xf32>
    %60 = arith.mulf %2, %59 : vector<32x4xf32>
    %61 = arith.index_cast %52 : i32 to index
    %c0_26 = arith.constant 0 : index
    %c0_27 = arith.constant 0 : index
    %62 = vector.load %arg4[%61, %c0_26, %c0_27] : memref<2x4x256xbf16, #tpu.memory_space<vmem>>, vector<1x4x256xbf16>
    %63 = vector.shape_cast %62 : vector<1x4x256xbf16> to vector<4x256xbf16>
    %64 = arith.extf %63 : vector<4x256xbf16> to vector<4x256xf32>
    %65 = arith.index_cast %52 : i32 to index
    %c0_28 = arith.constant 0 : index
    %c0_29 = arith.constant 0 : index
    %66 = vector.load %arg5[%65, %c0_28, %c0_29] : memref<2x4x256xbf16, #tpu.memory_space<vmem>>, vector<1x4x256xbf16>
    %67 = vector.shape_cast %66 : vector<1x4x256xbf16> to vector<4x256xbf16>
    %68 = arith.extf %67 : vector<4x256xbf16> to vector<4x256xf32>
    %cst_30 = arith.constant dense<0.000000e+00> : vector<32x256xf32>
    %69 = tpu.matmul %56, %64, %cst_30 {dimension_numbers = #tpu.dot_dimension_numbers<[1], [0], [0], [1], [0, 0, 1, 1], [], []>} : vector<32x4xf32>, vector<4x256xf32>, vector<32x256xf32> -> vector<32x256xf32>
    %cst_31 = arith.constant dense<0.000000e+00> : vector<32x256xf32>
    %70 = tpu.matmul %60, %68, %cst_31 {dimension_numbers = #tpu.dot_dimension_numbers<[1], [0], [0], [1], [0, 0, 1, 1], [], []>} : vector<32x4xf32>, vector<4x256xf32>, vector<32x256xf32> -> vector<32x256xf32>
    %71 = arith.addf %69, %70 : vector<32x256xf32>
    %72 = arith.index_cast %52 : i32 to index
    %c0_32 = arith.constant 0 : index
    %c0_33 = arith.constant 0 : index
    %73 = vector.load %arg6[%72, %c0_32, %c0_33] : memref<2x32x1xf32, #tpu.memory_space<vmem>>, vector<1x32x1xf32>
    %74 = vector.shape_cast %73 : vector<1x32x1xf32> to vector<32x1xf32>
    %75 = vector.broadcast %74 : vector<32x1xf32> to vector<32x256xf32>
    %76 = arith.addf %71, %75 : vector<32x256xf32>
    %cst_34 = arith.constant 0.000000e+00 : f32
    %77 = vector.broadcast %cst_34 : f32 to vector<32x256xf32>
    %78 = arith.maximumf %76, %77 : vector<32x256xf32>
    %79 = arith.index_cast %52 : i32 to index
    %c0_35 = arith.constant 0 : index
    %c0_36 = arith.constant 0 : index
    %80 = vector.load %arg7[%79, %c0_35, %c0_36] : memref<2x32x1xf32, #tpu.memory_space<vmem>>, vector<1x32x1xf32>
    %81 = vector.shape_cast %80 : vector<1x32x1xf32> to vector<32x1xf32>
    %82 = vector.broadcast %81 : vector<32x1xf32> to vector<32x256xf32>
    %83 = arith.addf %71, %82 : vector<32x256xf32>
    %cst_37 = arith.constant 0.000000e+00 : f32
    %84 = vector.broadcast %cst_37 : f32 to vector<32x256xf32>
    %85 = arith.maximumf %83, %84 : vector<32x256xf32>
    %86 = arith.subf %85, %78 : vector<32x256xf32>
    %87 = vector.broadcast %0 : f32 to vector<32x256xf32>
    %88 = arith.mulf %86, %87 : vector<32x256xf32>
    %89 = arith.addf %78, %88 : vector<32x256xf32>
    %cst_38 = arith.constant dense<0.000000e+00> : vector<4x256xf32>
    %90 = tpu.matmul %3, %89, %cst_38 {dimension_numbers = #tpu.dot_dimension_numbers<[1], [0], [0], [1], [0, 0, 1, 1], [], []>} : vector<4x32xf32>, vector<32x256xf32>, vector<4x256xf32> -> vector<4x256xf32>
    %91 = vector.broadcast %4 : vector<4x1xf32> to vector<4x256xf32>
    %92 = arith.addf %90, %91 : vector<4x256xf32>
    %93 = arith.index_cast %52 : i32 to index
    %c0_39 = arith.constant 0 : index
    %c0_40 = arith.constant 0 : index
    %94 = vector.load %arg12[%93, %c0_39, %c0_40] : memref<2x4x256xf32, #tpu.memory_space<vmem>>, vector<1x4x256xf32>
    %95 = vector.shape_cast %94 : vector<1x4x256xf32> to vector<4x256xf32>
    %96 = vector.shape_cast %92 : vector<4x256xf32> to vector<1x4x256xf32>
    tpu.vector_store %arg12[%93, %c0_39, %c0_40], %96 {strides = array<i32>} : memref<2x4x256xf32, #tpu.memory_space<vmem>>, vector<1x4x256xf32>,
    %c2_i32 = arith.constant 2 : i32
    return
  }
  func.func @transform_0(%arg0: i32) -> i32 {
    %c0_i32 = arith.constant 0 : i32
    %c0_i32_0 = arith.constant 0 : i32
    return %c0_i32 : i32
  }
  func.func @transform_1(%arg0: i32) -> i32 {
    %c0_i32 = arith.constant 0 : i32
    %c0_i32_0 = arith.constant 0 : i32
    return %c0_i32 : i32
  }
  func.func @transform_2(%arg0: i32) -> i32 {
    %c0_i32 = arith.constant 0 : i32
    %c0_i32_0 = arith.constant 0 : i32
    return %c0_i32 : i32
  }
  func.func @transform_3(%arg0: i32) -> (i32, i32, i32) {
    %c0_i32 = arith.constant 0 : i32
    %c0_i32_0 = arith.constant 0 : i32
    %c0_i32_1 = arith.constant 0 : i32
    return %c0_i32, %c0_i32_0, %arg0 : i32, i32, i32
  }
  func.func @transform_4(%arg0: i32) -> (i32, i32, i32) {
    %c0_i32 = arith.constant 0 : i32
    %c0_i32_0 = arith.constant 0 : i32
    %c0_i32_1 = arith.constant 0 : i32
    return %c0_i32, %c0_i32_0, %arg0 : i32, i32, i32
  }
  func.func @transform_5(%arg0: i32) -> (i32, i32, i32) {
    %c0_i32 = arith.constant 0 : i32
    %c0_i32_0 = arith.constant 0 : i32
    %c0_i32_1 = arith.constant 0 : i32
    %c0_i32_2 = arith.constant 0 : i32
    return %c0_i32, %c0_i32_0, %c0_i32_1 : i32, i32, i32
  }
  func.func @transform_6(%arg0: i32) -> (i32, i32, i32) {
    %c0_i32 = arith.constant 0 : i32
    %c0_i32_0 = arith.constant 0 : i32
    %c0_i32_1 = arith.constant 0 : i32
    %c0_i32_2 = arith.constant 0 : i32
    return %c0_i32, %c0_i32_0, %c0_i32_1 : i32, i32, i32
  }
  func.func @transform_7(%arg0: i32) -> (i32, i32) {
    %c0_i32 = arith.constant 0 : i32
    %c0_i32_0 = arith.constant 0 : i32
    %c0_i32_1 = arith.constant 0 : i32
    return %c0_i32, %c0_i32_0 : i32, i32
  }
  func.func @transform_8(%arg0: i32) -> (i32, i32) {
    %c0_i32 = arith.constant 0 : i32
    %c0_i32_0 = arith.constant 0 : i32
    %c0_i32_1 = arith.constant 0 : i32
    return %c0_i32, %c0_i32_0 : i32, i32
  }
  func.func @transform_9(%arg0: i32) -> (i32, i32) {
    %c0_i32 = arith.constant 0 : i32
    %c0_i32_0 = arith.constant 0 : i32
    %c0_i32_1 = arith.constant 0 : i32
    return %c0_i32, %c0_i32_0 : i32, i32
  }
  func.func @transform_10(%arg0: i32) -> (i32, i32) {
    %c0_i32 = arith.constant 0 : i32
    %c0_i32_0 = arith.constant 0 : i32
    %c0_i32_1 = arith.constant 0 : i32
    return %c0_i32, %c0_i32_0 : i32, i32
  }
  func.func @transform_11(%arg0: i32) -> (i32, i32, i32) {
    %c0_i32 = arith.constant 0 : i32
    %c0_i32_0 = arith.constant 0 : i32
    %c0_i32_1 = arith.constant 0 : i32
    return %c0_i32, %c0_i32_0, %arg0 : i32, i32, i32
  }
}

</mosaic_0001>

<llo_original>
// kernel: tpu_custom_call.1
$region0: #{tpu_custom_call.1}
  #allocation0 [shape = 'u32[]', space=smem, size = 0x4, offset = 0x4, fixed_abs, tag = 'smem constant byte address 0x4 - core index']
  #allocation1 [shape = 'u32[144,128]{1,0:T(1,128)}', space=vmem, size = 0x12000, scoped, tag = 'internal scratch']
  #allocation2 [shape = 'f32[1]{0:T(128)S(6)}', space=smem, size = 0x200, scoped, tag = 'scoped memory for tpu_custom_call.1']
  %s0 = inlined_call_operand.vmem [shape: f32[2], index: 0, kind: input, shape index: {}]
  %s1 = inlined_call_operand.vmem [shape: f32[2], index: 1, kind: input, shape index: {}]
  %s2 = inlined_call_operand.<no memory space> [shape: f32[1], index: 2, kind: input, shape index: {}]
  %s3 = inlined_call_operand.vmem [shape: bf16[2,4,256], index: 3, kind: input, shape index: {}]
  %s4 = inlined_call_operand.vmem [shape: bf16[2,4,256], index: 4, kind: input, shape index: {}]
  %s5 = inlined_call_operand.vmem [shape: f32[2,32,1], index: 5, kind: input, shape index: {}]
  %s6 = inlined_call_operand.vmem [shape: f32[2,32,1], index: 6, kind: input, shape index: {}]
  %s7 = inlined_call_operand.vmem [shape: f32[32,4], index: 7, kind: input, shape index: {}]
  %s8 = inlined_call_operand.vmem [shape: f32[32,4], index: 8, kind: input, shape index: {}]
  %s9 = inlined_call_operand.vmem [shape: f32[4,32], index: 9, kind: input, shape index: {}]
  %s10 = inlined_call_operand.vmem [shape: f32[4,1], index: 10, kind: input, shape index: {}]
  %s11 = inlined_call_operand.hbm [shape: f32[2,4,256], index: 11, kind: output, shape index: {}]
  %s12 = sld [smem:[#allocation0]]
  $region62: #{tpu_custom_call.1} parent=0
    _
  %s14 = ssub.s32 1, %s12
  %s15 = scalar_select 0, %s14, %s12
  %16 = sst [smem:[#allocation2]] %s2
  $region1: #{tpu_custom_call.1} parent=0
    #allocation3 [shape = 'u8[512]{0}', space=smem, size = 0x200, scoped, tag = 'input window, operand 0, single buffered']
    #allocation4 [shape = 's32[1]{0}', space=sflag, size = 0x4, scoped, tag = 'scoped memory for tpu_custom_call.1']
    #allocation5 [shape = 's32[1]{0}', space=sflag, size = 0x4, scoped, tag = 'scoped memory for tpu_custom_call.1']
    #allocation6 [shape = 'u8[512]{0}', space=smem, size = 0x200, scoped, tag = 'input window, operand 1, single buffered']
    #allocation7 [shape = 's32[1]{0}', space=sflag, size = 0x4, scoped, tag = 'scoped memory for tpu_custom_call.1']
    #allocation8 [shape = 'u8[8192]{0}', space=vmem, size = 0x2000, scoped, tag = 'output window, operand 0, single buffered']
    %17 = vsyncpa [#allocation5], 0
    %18 = vsyncpa [#allocation7], 0
    %19 = vsyncpa [#allocation4], 0
    // Predicated region
    $region2: #{tpu_custom_call.1} parent=1 // pred_check
      _
    $region3: #{tpu_custom_call.1} parent=1 // pred_check_branch
      %21 = sbr.rel (0) target = $region5
    $region4: #{tpu_custom_call.1} parent=1 // pred_region
      %s23 = ssub.s32 16, 16
      %24 = vsyncadd [#allocation5], %s23
      %s26 = sshll.u32 %s0, 4
      %s27 = int_to_ptr.vmem [resolvable:$true] %s26
      %29 = dma.vmem_to_smem %s27, 16, [#allocation3], [#allocation5]
    $region5: #{tpu_custom_call.1} parent=1 // pred_fallthru
      _
    // Predicated region
    $region6: #{tpu_custom_call.1} parent=1 // pred_check
      _
    $region7: #{tpu_custom_call.1} parent=1 // pred_check_branch
      %31 = sbr.rel (0) target = $region9
    $region8: #{tpu_custom_call.1} parent=1 // pred_region
      %s33 = ssub.s32 16, 16
      %34 = vsyncadd [#allocation7], %s33
      %s36 = sshll.u32 %s1, 4
      %s37 = int_to_ptr.vmem [resolvable:$true] %s36
      %39 = dma.vmem_to_smem %s37, 16, [#allocation6], [#allocation7]
    $region9: #{tpu_custom_call.1} parent=1 // pred_fallthru
      _
    // Predicated region
    $region10: #{tpu_custom_call.1} parent=1 // pred_check
      _
    $region11: #{tpu_custom_call.1} parent=1 // pred_check_branch
      %41 = sbr.rel (0) target = $region13
    $region12: #{tpu_custom_call.1} parent=1 // pred_region
      _
    $region13: #{tpu_custom_call.1} parent=1 // pred_fallthru
      _
    // Predicated region
    $region14: #{tpu_custom_call.1} parent=1 // pred_check
      _
    $region15: #{tpu_custom_call.1} parent=1 // pred_check_branch
      %43 = sbr.rel (0) target = $region17
    $region16: #{tpu_custom_call.1} parent=1 // pred_region
      _
    $region17: #{tpu_custom_call.1} parent=1 // pred_fallthru
      _
    // Predicated region
    $region18: #{tpu_custom_call.1} parent=1 // pred_check
      _
    $region19: #{tpu_custom_call.1} parent=1 // pred_check_branch
      %45 = sbr.rel (0) target = $region21
    $region20: #{tpu_custom_call.1} parent=1 // pred_region
      _
    $region21: #{tpu_custom_call.1} parent=1 // pred_fallthru
      _
    // Predicated region
    $region22: #{tpu_custom_call.1} parent=1 // pred_check
      _
    $region23: #{tpu_custom_call.1} parent=1 // pred_check_branch
      %47 = sbr.rel (0) target = $region25
    $region24: #{tpu_custom_call.1} parent=1 // pred_region
      _
    $region25: #{tpu_custom_call.1} parent=1 // pred_fallthru
      _
    // Predicated region
    $region26: #{tpu_custom_call.1} parent=1 // pred_check
      _
    $region27: #{tpu_custom_call.1} parent=1 // pred_check_branch
      %49 = sbr.rel (0) target = $region29
    $region28: #{tpu_custom_call.1} parent=1 // pred_region
      _
    $region29: #{tpu_custom_call.1} parent=1 // pred_fallthru
      _
    // Predicated region
    $region30: #{tpu_custom_call.1} parent=1 // pred_check
      _
    $region31: #{tpu_custom_call.1} parent=1 // pred_check_branch
      %51 = sbr.rel (0) target = $region33
    $region32: #{tpu_custom_call.1} parent=1 // pred_region
      _
    $region33: #{tpu_custom_call.1} parent=1 // pred_fallthru
      _
    // Predicated region
    $region34: #{tpu_custom_call.1} parent=1 // pred_check
      _
    $region35: #{tpu_custom_call.1} parent=1 // pred_check_branch
      %53 = sbr.rel (0) target = $region37
    $region36: #{tpu_custom_call.1} parent=1 // pred_region
      _
    $region37: #{tpu_custom_call.1} parent=1 // pred_fallthru
      _
    // Predicated region
    $region38: #{tpu_custom_call.1} parent=1 // pred_check
      _
    $region39: #{tpu_custom_call.1} parent=1 // pred_check_branch
      %55 = sbr.rel (0) target = $region41
    $region40: #{tpu_custom_call.1} parent=1 // pred_region
      _
    $region41: #{tpu_custom_call.1} parent=1 // pred_fallthru
      _
    // Predicated region
    $region42: #{tpu_custom_call.1} parent=1 // pred_check
      _
    $region43: #{tpu_custom_call.1} parent=1 // pred_check_branch
      %57 = sbr.rel (0) target = $region45
    $region44: #{tpu_custom_call.1} parent=1 // pred_region
      _
    $region45: #{tpu_custom_call.1} parent=1 // pred_fallthru
      _
    // Predicated region
    $region46: #{tpu_custom_call.1} parent=1 // pred_check
      _
    $region47: #{tpu_custom_call.1} parent=1 // pred_check_branch
      %59 = sbr.rel (0) target = $region49
    $region48: #{tpu_custom_call.1} parent=1 // pred_region
      %60 = dma.done [#allocation5], 16
    $region49: #{tpu_custom_call.1} parent=1 // pred_fallthru
      _
    // Predicated region
    $region50: #{tpu_custom_call.1} parent=1 // pred_check
      _
    $region51: #{tpu_custom_call.1} parent=1 // pred_check_branch
      %62 = sbr.rel (0) target = $region53
    $region52: #{tpu_custom_call.1} parent=1 // pred_region
      %63 = dma.done [#allocation7], 16
    $region53: #{tpu_custom_call.1} parent=1 // pred_fallthru
      _
    %64 = sfence
    %s65 = sld [smem:[#allocation2]]
    %v66 = vld [vmem:[%s7] sm:$0xff]
    %v67 = vld [vmem:[%s7 + $0x8] sm:$0xff]
    %v68 = vld [vmem:[%s7 + $0x10] sm:$0xff]
    %v69 = vld [vmem:[%s7 + $0x18] sm:$0xff]
    %v70 = vld [vmem:[%s8] sm:$0xff]
    %v71 = vld [vmem:[%s8 + $0x8] sm:$0xff]
    %v72 = vld [vmem:[%s8 + $0x10] sm:$0xff]
    %v73 = vld [vmem:[%s8 + $0x18] sm:$0xff]
    %v74 = vld [vmem:[%s9] sm:$0xf]
    %v75 = vld [vmem:[%s10] sm:$0xf]
    %s76 = sld [smem:[#allocation3]]
    %v77 = vstv %s76
    %v78 = vmul.f32 %v66, %v77
    %v79 = vmul.f32 %v67, %v77
    %v80 = vmul.f32 %v68, %v77
    %v81 = vmul.f32 %v69, %v77
    %s82 = sld [smem:[#allocation6]]
    %v83 = vstv %s82
    %v84 = vmul.f32 %v70, %v83
    %v85 = vmul.f32 %v71, %v83
    %v86 = vmul.f32 %v72, %v83
    %v87 = vmul.f32 %v73, %v83
    %v88 = vld [vmem:[%s3] sm:$0xf]
    %v89 = vunpack.c.l.bf16 %v88
    %v90 = vld [vmem:[%s4] sm:$0xf]
    %v91 = vunpack.c.l.bf16 %v90
    %v93 = vcombine.high %v91, %v91
    %vm94 = vcmask 31744
    %v96 = vsel %vm94, %v84, 0
    %v99 = vsel %vm94, %v85, 0
    %v102 = vsel %vm94, %v86, 0
    %v105 = vsel %vm94, %v87, 0
    %vm107 = vcmask 1043456
    %v108 = vsel %vm107, %v91, 0
    %v110 = vsel %vm107, %v93, 0
    %112 = vmatprep.subr.mxu0 %v110
    %113 = vmatpush1.msra.mxu0 %v108
    %114 = vmatprep.subr.mxu0 0.0
    %115 = vmatpush1.msra.mxu0 0.0
    %116 = vmatprep.subr.mxu0 0.0
    %117 = vmatpush1.msra.mxu0 0.0
    %118 = vmatprep.subr.mxu0 0.0
    %119 = vmatpush1.msra.mxu0 0.0
    %120 = vmatprep.subr.mxu0 0.0
    %121 = vmatpush1.msra.mxu0 0.0
    %122 = vmatprep.subr.mxu0 0.0
    %123 = vmatpush1.msra.mxu0 0.0
    %124 = vmatprep.subr.mxu0 0.0
    %125 = vmatpush1.msra.mxu0 0.0
    %126 = vmatprep.subr.mxu0 0.0
    %127 = vmatpush1.msra.mxu0 0.0
    %128 = vmatprep.subr.mxu0 0.0
    %129 = vmatpush1.msra.mxu0 0.0
    %130 = vmatprep.subr.mxu0 0.0
    %131 = vmatpush1.msra.mxu0 0.0
    %132 = vmatprep.subr.mxu0 0.0
    %133 = vmatpush1.msra.mxu0 0.0
    %134 = vmatprep.subr.mxu0 0.0
    %135 = vmatpush1.msra.mxu0 0.0
    %136 = vmatprep.subr.mxu0 0.0
    %137 = vmatpush1.msra.mxu0 0.0
    %138 = vmatprep.subr.mxu0 0.0
    %139 = vmatpush1.msra.mxu0 0.0
    %140 = vmatprep.subr.mxu0 0.0
    %141 = vmatpush1.msra.mxu0 0.0
    %142 = vmatprep.subr.mxu0 0.0
    %143 = vmatpush1.msra.mxu0 0.0
    %144 = vmatprep.subr.mxu0 0.0
    %145 = vmatpush1.msra.mxu0 0.0
    %146 = vmatprep.subr.mxu0 0.0
    %147 = vmatpush1.msra.mxu0 0.0
    %148 = vmatprep.subr.mxu0 0.0
    %149 = vmatpush1.msra.mxu0 0.0
    %150 = vmatprep.subr.mxu0 0.0
    %151 = vmatpush1.msra.mxu0 0.0
    %152 = vmatprep.subr.mxu0 0.0
    %153 = vmatpush1.msra.mxu0 0.0
    %154 = vmatprep.subr.mxu0 0.0
    %155 = vmatpush1.msra.mxu0 0.0
    %156 = vmatprep.subr.mxu0 0.0
    %157 = vmatpush1.msra.mxu0 0.0
    %158 = vmatprep.subr.mxu0 0.0
    %159 = vmatpush1.msra.mxu0 0.0
    %160 = vmatprep.subr.mxu0 0.0
    %161 = vmatpush1.msra.mxu0 0.0
    %162 = vmatprep.subr.mxu0 0.0
    %163 = vmatpush1.msra.mxu0 0.0
    %164 = vmatprep.subr.mxu0 0.0
    %165 = vmatpush1.msra.mxu0 0.0
    %166 = vmatprep.subr.mxu0 0.0
    %167 = vmatpush1.msra.mxu0 0.0
    %168 = vmatprep.subr.mxu0 0.0
    %169 = vmatpush1.msra.mxu0 0.0
    %170 = vmatprep.subr.mxu0 0.0
    %171 = vmatpush1.msra.mxu0 0.0
    %172 = vmatprep.subr.mxu0 0.0
    %173 = vmatpush1.msra.mxu0 0.0
    %174 = vmatprep.subr.mxu0 0.0
    %175 = vmatpush1.msra.mxu0 0.0
    %176 = vmatprep.mubr.f32.mxu0 0.0
    %177 = vmatmul.mubr.f32.gmra.mrb[0].mxu0 %v96
    %v178 = vpop.f32.mrb[0].mxu0
    %v179 = vadd.f32 0.0, %v178
    %v180 = vpop.f32.mrb[0].mxu0
    %v181 = vadd.f32 0.0, %v180
    %182 = vmatprep.mubr.f32.mxu0 0.0
    %183 = vmatmul.mubr.f32.gmra.mrb[0].mxu0 %v99
    %v184 = vpop.f32.mrb[0].mxu0
    %v185 = vadd.f32 0.0, %v184
    %v186 = vpop.f32.mrb[0].mxu0
    %v187 = vadd.f32 0.0, %v186
    %188 = vmatprep.mubr.f32.mxu0 0.0
    %189 = vmatmul.mubr.f32.gmra.mrb[0].mxu0 %v102
    %v190 = vpop.f32.mrb[0].mxu0
    %v191 = vadd.f32 0.0, %v190
    %v192 = vpop.f32.mrb[0].mxu0
    %v193 = vadd.f32 0.0, %v192
    %194 = vmatprep.mubr.f32.mxu0 0.0
    %195 = vmatmul.mubr.f32.gmra.mrb[0].mxu0 %v105
    %v196 = vpop.f32.mrb[0].mxu0
    %v197 = vadd.f32 0.0, %v196
    %v198 = vpop.f32.mrb[0].mxu0
    %v199 = vadd.f32 0.0, %v198
    %200 = vdwg.mxu0
    %v202 = vcombine.high %v89, %v89
    %v204 = vsel %vm94, %v78, 0
    %v207 = vsel %vm94, %v79, 0
    %v210 = vsel %vm94, %v80, 0
    %v213 = vsel %vm94, %v81, 0
    %v215 = vsel %vm107, %v89, 0
    %v217 = vsel %vm107, %v202, 0
    %219 = vmatprep.subr.mxu0 %v217
    %220 = vmatpush1.msra.mxu0 %v215
    %221 = vmatprep.subr.mxu0 0.0
    %222 = vmatpush1.msra.mxu0 0.0
    %223 = vmatprep.subr.mxu0 0.0
    %224 = vmatpush1.msra.mxu0 0.0
    %225 = vmatprep.subr.mxu0 0.0
    %226 = vmatpush1.msra.mxu0 0.0
    %227 = vmatprep.subr.mxu0 0.0
    %228 = vmatpush1.msra.mxu0 0.0
    %229 = vmatprep.subr.mxu0 0.0
    %230 = vmatpush1.msra.mxu0 0.0
    %231 = vmatprep.subr.mxu0 0.0
    %232 = vmatpush1.msra.mxu0 0.0
    %233 = vmatprep.subr.mxu0 0.0
    %234 = vmatpush1.msra.mxu0 0.0
    %235 = vmatprep.subr.mxu0 0.0
    %236 = vmatpush1.msra.mxu0 0.0
    %237 = vmatprep.subr.mxu0 0.0
    %238 = vmatpush1.msra.mxu0 0.0
    %239 = vmatprep.subr.mxu0 0.0
    %240 = vmatpush1.msra.mxu0 0.0
    %241 = vmatprep.subr.mxu0 0.0
    %242 = vmatpush1.msra.mxu0 0.0
    %243 = vmatprep.subr.mxu0 0.0
    %244 = vmatpush1.msra.mxu0 0.0
    %245 = vmatprep.subr.mxu0 0.0
    %246 = vmatpush1.msra.mxu0 0.0
    %247 = vmatprep.subr.mxu0 0.0
    %248 = vmatpush1.msra.mxu0 0.0
    %249 = vmatprep.subr.mxu0 0.0
    %250 = vmatpush1.msra.mxu0 0.0
    %251 = vmatprep.subr.mxu0 0.0
    %252 = vmatpush1.msra.mxu0 0.0
    %253 = vmatprep.subr.mxu0 0.0
    %254 = vmatpush1.msra.mxu0 0.0
    %255 = vmatprep.subr.mxu0 0.0
    %256 = vmatpush1.msra.mxu0 0.0
    %257 = vmatprep.subr.mxu0 0.0
    %258 = vmatpush1.msra.mxu0 0.0
    %259 = vmatprep.subr.mxu0 0.0
    %260 = vmatpush1.msra.mxu0 0.0
    %261 = vmatprep.subr.mxu0 0.0
    %262 = vmatpush1.msra.mxu0 0.0
    %263 = vmatprep.subr.mxu0 0.0
    %264 = vmatpush1.msra.mxu0 0.0
    %265 = vmatprep.subr.mxu0 0.0
    %266 = vmatpush1.msra.mxu0 0.0
    %267 = vmatprep.subr.mxu0 0.0
    %268 = vmatpush1.msra.mxu0 0.0
    %269 = vmatprep.subr.mxu0 0.0
    %270 = vmatpush1.msra.mxu0 0.0
    %271 = vmatprep.subr.mxu0 0.0
    %272 = vmatpush1.msra.mxu0 0.0
    %273 = vmatprep.subr.mxu0 0.0
    %274 = vmatpush1.msra.mxu0 0.0
    %275 = vmatprep.subr.mxu0 0.0
    %276 = vmatpush1.msra.mxu0 0.0
    %277 = vmatprep.subr.mxu0 0.0
    %278 = vmatpush1.msra.mxu0 0.0
    %279 = vmatprep.subr.mxu0 0.0
    %280 = vmatpush1.msra.mxu0 0.0
    %281 = vmatprep.subr.mxu0 0.0
    %282 = vmatpush1.msra.mxu0 0.0
    %283 = vmatprep.mubr.f32.mxu0 0.0
    %284 = vmatmul.mubr.f32.gmra.mrb[0].mxu0 %v204
    %v285 = vpop.f32.mrb[0].mxu0
    %v286 = vadd.f32 %v179, %v285
    %v287 = vpop.f32.mrb[0].mxu0
    %v288 = vadd.f32 %v181, %v287
    %289 = vmatprep.mubr.f32.mxu0 0.0
    %290 = vmatmul.mubr.f32.gmra.mrb[0].mxu0 %v207
    %v291 = vpop.f32.mrb[0].mxu0
    %v292 = vadd.f32 %v185, %v291
    %v293 = vpop.f32.mrb[0].mxu0
    %v294 = vadd.f32 %v187, %v293
    %295 = vmatprep.mubr.f32.mxu0 0.0
    %296 = vmatmul.mubr.f32.gmra.mrb[0].mxu0 %v210
    %v297 = vpop.f32.mrb[0].mxu0
    %v298 = vadd.f32 %v191, %v297
    %v299 = vpop.f32.mrb[0].mxu0
    %v300 = vadd.f32 %v193, %v299
    %301 = vmatprep.mubr.f32.mxu0 0.0
    %302 = vmatmul.mubr.f32.gmra.mrb[0].mxu0 %v213
    %v303 = vpop.f32.mrb[0].mxu0
    %v304 = vadd.f32 %v197, %v303
    %v305 = vpop.f32.mrb[0].mxu0
    %v306 = vadd.f32 %v199, %v305
    %307 = vdwg.mxu0
    %v308 = vld [vmem:[%s5] sm:$0xff]
    %v309 = vld [vmem:[%s5 + $0x8] sm:$0xff]
    %v310 = vld [vmem:[%s5 + $0x10] sm:$0xff]
    %v311 = vld [vmem:[%s5 + $0x18] sm:$0xff]
    %313 = vset.pattern.permute.xlu0 0
    %314 = vperm.xlu0 %313, %v308
    %v315 = vpop.permute.xlu0 %314
    %318 = vset.pattern.permute.xlu0 0
    %319 = vperm.xlu0 %318, %v309
    %v320 = vpop.permute.xlu0 %319
    %323 = vset.pattern.permute.xlu0 0
    %324 = vperm.xlu0 %323, %v310
    %v325 = vpop.permute.xlu0 %324
    %328 = vset.pattern.permute.xlu0 0
    %329 = vperm.xlu0 %328, %v311
    %v330 = vpop.permute.xlu0 %329
    %v332 = vadd.f32 %v286, %v315
    %v333 = vadd.f32 %v288, %v315
    %v334 = vadd.f32 %v292, %v320
    %v335 = vadd.f32 %v294, %v320
    %v336 = vadd.f32 %v298, %v325
    %v337 = vadd.f32 %v300, %v325
    %v338 = vadd.f32 %v304, %v330
    %v339 = vadd.f32 %v306, %v330
    %v340 = vmax.f32 %v332, 0.0
    %v341 = vmax.f32 %v333, 0.0
    %v342 = vmax.f32 %v334, 0.0
    %v343 = vmax.f32 %v335, 0.0
    %v344 = vmax.f32 %v336, 0.0
    %v345 = vmax.f32 %v337, 0.0
    %v346 = vmax.f32 %v338, 0.0
    %v347 = vmax.f32 %v339, 0.0
    %v348 = vld [vmem:[%s6] sm:$0xff]
    %v349 = vld [vmem:[%s6 + $0x8] sm:$0xff]
    %v350 = vld [vmem:[%s6 + $0x10] sm:$0xff]
    %v351 = vld [vmem:[%s6 + $0x18] sm:$0xff]
    %353 = vset.pattern.permute.xlu0 0
    %354 = vperm.xlu0 %353, %v348
    %v355 = vpop.permute.xlu0 %354
    %358 = vset.pattern.permute.xlu0 0
    %359 = vperm.xlu0 %358, %v349
    %v360 = vpop.permute.xlu0 %359
    %363 = vset.pattern.permute.xlu0 0
    %364 = vperm.xlu0 %363, %v350
    %v365 = vpop.permute.xlu0 %364
    %368 = vset.pattern.permute.xlu0 0
    %369 = vperm.xlu0 %368, %v351
    %v370 = vpop.permute.xlu0 %369
    %v372 = vadd.f32 %v286, %v355
    %v373 = vadd.f32 %v288, %v355
    %v374 = vadd.f32 %v292, %v360
    %v375 = vadd.f32 %v294, %v360
    %v376 = vadd.f32 %v298, %v365
    %v377 = vadd.f32 %v300, %v365
    %v378 = vadd.f32 %v304, %v370
    %v379 = vadd.f32 %v306, %v370
    %v380 = vmax.f32 %v372, 0.0
    %v381 = vmax.f32 %v373, 0.0
    %v382 = vmax.f32 %v374, 0.0
    %v383 = vmax.f32 %v375, 0.0
    %v384 = vmax.f32 %v376, 0.0
    %v385 = vmax.f32 %v377, 0.0
    %v386 = vmax.f32 %v378, 0.0
    %v387 = vmax.f32 %v379, 0.0
    %v388 = vsub.f32 %v380, %v340
    %v389 = vsub.f32 %v381, %v341
    %v390 = vsub.f32 %v382, %v342
    %v391 = vsub.f32 %v383, %v343
    %v392 = vsub.f32 %v384, %v344
    %v393 = vsub.f32 %v385, %v345
    %v394 = vsub.f32 %v386, %v346
    %v395 = vsub.f32 %v387, %v347
    %v396 = vstv %s65
    %v397 = vmul.f32 %v388, %v396
    %v398 = vmul.f32 %v389, %v396
    %v399 = vmul.f32 %v390, %v396
    %v400 = vmul.f32 %v391, %v396
    %v401 = vmul.f32 %v392, %v396
    %v402 = vmul.f32 %v393, %v396
    %v403 = vmul.f32 %v394, %v396
    %v404 = vmul.f32 %v395, %v396
    %v405 = vadd.f32 %v340, %v397
    %v406 = vadd.f32 %v341, %v398
    %v407 = vadd.f32 %v342, %v399
    %v408 = vadd.f32 %v343, %v400
    %v409 = vadd.f32 %v344, %v401
    %v410 = vadd.f32 %v345, %v402
    %v411 = vadd.f32 %v346, %v403
    %v412 = vadd.f32 %v347, %v404
    %414 = vset.pattern.permute.xlu0 0
    %415 = vperm.xlu0 %414, %v75
    %v416 = vpop.permute.xlu0 %415
    %vm418 = vcmask 261120
    %v420 = vsel %vm418, %v74, 0
    %422 = vmatprep.subr.mxu0 %v406
    %423 = vmatpush1.msra.mxu0 %v405
    %424 = vmatprep.subr.mxu0 %v408
    %425 = vmatpush1.msra.mxu0 %v407
    %426 = vmatprep.subr.mxu0 %v410
    %427 = vmatpush1.msra.mxu0 %v409
    %428 = vmatprep.subr.mxu0 %v412
    %429 = vmatpush1.msra.mxu0 %v411
    %430 = vmatprep.subr.mxu0 0.0
    %431 = vmatpush1.msra.mxu0 0.0
    %432 = vmatprep.subr.mxu0 0.0
    %433 = vmatpush1.msra.mxu0 0.0
    %434 = vmatprep.subr.mxu0 0.0
    %435 = vmatpush1.msra.mxu0 0.0
    %436 = vmatprep.subr.mxu0 0.0
    %437 = vmatpush1.msra.mxu0 0.0
    %438 = vmatprep.subr.mxu0 0.0
    %439 = vmatpush1.msra.mxu0 0.0
    %440 = vmatprep.subr.mxu0 0.0
    %441 = vmatpush1.msra.mxu0 0.0
    %442 = vmatprep.subr.mxu0 0.0
    %443 = vmatpush1.msra.mxu0 0.0
    %444 = vmatprep.subr.mxu0 0.0
    %445 = vmatpush1.msra.mxu0 0.0
    %446 = vmatprep.subr.mxu0 0.0
    %447 = vmatpush1.msra.mxu0 0.0
    %448 = vmatprep.subr.mxu0 0.0
    %449 = vmatpush1.msra.mxu0 0.0
    %450 = vmatprep.subr.mxu0 0.0
    %451 = vmatpush1.msra.mxu0 0.0
    %452 = vmatprep.subr.mxu0 0.0
    %453 = vmatpush1.msra.mxu0 0.0
    %454 = vmatprep.subr.mxu0 0.0
    %455 = vmatpush1.msra.mxu0 0.0
    %456 = vmatprep.subr.mxu0 0.0
    %457 = vmatpush1.msra.mxu0 0.0
    %458 = vmatprep.subr.mxu0 0.0
    %459 = vmatpush1.msra.mxu0 0.0
    %460 = vmatprep.subr.mxu0 0.0
    %461 = vmatpush1.msra.mxu0 0.0
    %462 = vmatprep.subr.mxu0 0.0
    %463 = vmatpush1.msra.mxu0 0.0
    %464 = vmatprep.subr.mxu0 0.0
    %465 = vmatpush1.msra.mxu0 0.0
    %466 = vmatprep.subr.mxu0 0.0
    %467 = vmatpush1.msra.mxu0 0.0
    %468 = vmatprep.subr.mxu0 0.0
    %469 = vmatpush1.msra.mxu0 0.0
    %470 = vmatprep.subr.mxu0 0.0
    %471 = vmatpush1.msra.mxu0 0.0
    %472 = vmatprep.subr.mxu0 0.0
    %473 = vmatpush1.msra.mxu0 0.0
    %474 = vmatprep.subr.mxu0 0.0
    %475 = vmatpush1.msra.mxu0 0.0
    %476 = vmatprep.subr.mxu0 0.0
    %477 = vmatpush1.msra.mxu0 0.0
    %478 = vmatprep.subr.mxu0 0.0
    %479 = vmatpush1.msra.mxu0 0.0
    %480 = vmatprep.subr.mxu0 0.0
    %481 = vmatpush1.msra.mxu0 0.0
    %482 = vmatprep.subr.mxu0 0.0
    %483 = vmatpush1.msra.mxu0 0.0
    %484 = vmatprep.subr.mxu0 0.0
    %485 = vmatpush1.msra.mxu0 0.0
    %486 = vmatprep.mubr.f32.mxu0 0.0
    %487 = vmatmul.mubr.f32.gmra.mrb[0].mxu0 %v420
    %v488 = vpop.f32.mrb[0].mxu0
    %v489 = vadd.f32 %v416, %v488
    %v490 = vpop.f32.mrb[0].mxu0
    %v491 = vadd.f32 %v416, %v490
    %492 = vdwg.mxu0
    %v495 = vcombine.low %v489, %v491
    %497 = vst [vmem:[#allocation8] sm:$0xff] %v495
    %s498 = sld [smem:[#allocation3 + $0x1]]
    %v499 = vstv %s498
    %v500 = vmul.f32 %v66, %v499
    %v501 = vmul.f32 %v67, %v499
    %v502 = vmul.f32 %v68, %v499
    %v503 = vmul.f32 %v69, %v499
    %s504 = sld [smem:[#allocation6 + $0x1]]
    %v505 = vstv %s504
    %v506 = vmul.f32 %v70, %v505
    %v507 = vmul.f32 %v71, %v505
    %v508 = vmul.f32 %v72, %v505
    %v509 = vmul.f32 %v73, %v505
    %s510 = scalar_lea.vmem %s3, 4
    %v511 = vld [vmem:[%s510] sm:$0xf]
    %v512 = vunpack.c.l.bf16 %v511
    %s513 = scalar_lea.vmem %s4, 4
    %v514 = vld [vmem:[%s513] sm:$0xf]
    %v515 = vunpack.c.l.bf16 %v514
    %v517 = vcombine.high %v515, %v515
    %v519 = vsel %vm94, %v506, 0
    %v522 = vsel %vm94, %v507, 0
    %v525 = vsel %vm94, %v508, 0
    %v528 = vsel %vm94, %v509, 0
    %v530 = vsel %vm107, %v515, 0
    %v532 = vsel %vm107, %v517, 0
    %534 = vmatprep.subr.mxu0 %v532
    %535 = vmatpush1.msra.mxu0 %v530
    %536 = vmatprep.subr.mxu0 0.0
    %537 = vmatpush1.msra.mxu0 0.0
    %538 = vmatprep.subr.mxu0 0.0
    %539 = vmatpush1.msra.mxu0 0.0
    %540 = vmatprep.subr.mxu0 0.0
    %541 = vmatpush1.msra.mxu0 0.0
    %542 = vmatprep.subr.mxu0 0.0
    %543 = vmatpush1.msra.mxu0 0.0
    %544 = vmatprep.subr.mxu0 0.0
    %545 = vmatpush1.msra.mxu0 0.0
    %546 = vmatprep.subr.mxu0 0.0
    %547 = vmatpush1.msra.mxu0 0.0
    %548 = vmatprep.subr.mxu0 0.0
    %549 = vmatpush1.msra.mxu0 0.0
    %550 = vmatprep.subr.mxu0 0.0
    %551 = vmatpush1.msra.mxu0 0.0
    %552 = vmatprep.subr.mxu0 0.0
    %553 = vmatpush1.msra.mxu0 0.0
    %554 = vmatprep.subr.mxu0 0.0
    %555 = vmatpush1.msra.mxu0 0.0
    %556 = vmatprep.subr.mxu0 0.0
    %557 = vmatpush1.msra.mxu0 0.0
    %558 = vmatprep.subr.mxu0 0.0
    %559 = vmatpush1.msra.mxu0 0.0
    %560 = vmatprep.subr.mxu0 0.0
    %561 = vmatpush1.msra.mxu0 0.0
    %562 = vmatprep.subr.mxu0 0.0
    %563 = vmatpush1.msra.mxu0 0.0
    %564 = vmatprep.subr.mxu0 0.0
    %565 = vmatpush1.msra.mxu0 0.0
    %566 = vmatprep.subr.mxu0 0.0
    %567 = vmatpush1.msra.mxu0 0.0
    %568 = vmatprep.subr.mxu0 0.0
    %569 = vmatpush1.msra.mxu0 0.0
    %570 = vmatprep.subr.mxu0 0.0
    %571 = vmatpush1.msra.mxu0 0.0
    %572 = vmatprep.subr.mxu0 0.0
    %573 = vmatpush1.msra.mxu0 0.0
    %574 = vmatprep.subr.mxu0 0.0
    %575 = vmatpush1.msra.mxu0 0.0
    %576 = vmatprep.subr.mxu0 0.0
    %577 = vmatpush1.msra.mxu0 0.0
    %578 = vmatprep.subr.mxu0 0.0
    %579 = vmatpush1.msra.mxu0 0.0
    %580 = vmatprep.subr.mxu0 0.0
    %581 = vmatpush1.msra.mxu0 0.0
    %582 = vmatprep.subr.mxu0 0.0
    %583 = vmatpush1.msra.mxu0 0.0
    %584 = vmatprep.subr.mxu0 0.0
    %585 = vmatpush1.msra.mxu0 0.0
    %586 = vmatprep.subr.mxu0 0.0
    %587 = vmatpush1.msra.mxu0 0.0
    %588 = vmatprep.subr.mxu0 0.0
    %589 = vmatpush1.msra.mxu0 0.0
    %590 = vmatprep.subr.mxu0 0.0
    %591 = vmatpush1.msra.mxu0 0.0
    %592 = vmatprep.subr.mxu0 0.0
    %593 = vmatpush1.msra.mxu0 0.0
    %594 = vmatprep.subr.mxu0 0.0
    %595 = vmatpush1.msra.mxu0 0.0
    %596 = vmatprep.subr.mxu0 0.0
    %597 = vmatpush1.msra.mxu0 0.0
    %598 = vmatprep.mubr.f32.mxu0 0.0
    %599 = vmatmul.mubr.f32.gmra.mrb[0].mxu0 %v519
    %v600 = vpop.f32.mrb[0].mxu0
    %v601 = vadd.f32 0.0, %v600
    %v602 = vpop.f32.mrb[0].mxu0
    %v603 = vadd.f32 0.0, %v602
    %604 = vmatprep.mubr.f32.mxu0 0.0
    %605 = vmatmul.mubr.f32.gmra.mrb[0].mxu0 %v522
    %v606 = vpop.f32.mrb[0].mxu0
    %v607 = vadd.f32 0.0, %v606
    %v608 = vpop.f32.mrb[0].mxu0
    %v609 = vadd.f32 0.0, %v608
    %610 = vmatprep.mubr.f32.mxu0 0.0
    %611 = vmatmul.mubr.f32.gmra.mrb[0].mxu0 %v525
    %v612 = vpop.f32.mrb[0].mxu0
    %v613 = vadd.f32 0.0, %v612
    %v614 = vpop.f32.mrb[0].mxu0
    %v615 = vadd.f32 0.0, %v614
    %616 = vmatprep.mubr.f32.mxu0 0.0
    %617 = vmatmul.mubr.f32.gmra.mrb[0].mxu0 %v528
    %v618 = vpop.f32.mrb[0].mxu0
    %v619 = vadd.f32 0.0, %v618
    %v620 = vpop.f32.mrb[0].mxu0
    %v621 = vadd.f32 0.0, %v620
    %622 = vdwg.mxu0
    %v624 = vcombine.high %v512, %v512
    %v626 = vsel %vm94, %v500, 0
    %v629 = vsel %vm94, %v501, 0
    %v632 = vsel %vm94, %v502, 0
    %v635 = vsel %vm94, %v503, 0
    %v637 = vsel %vm107, %v512, 0
    %v639 = vsel %vm107, %v624, 0
    %641 = vmatprep.subr.mxu0 %v639
    %642 = vmatpush1.msra.mxu0 %v637
    %643 = vmatprep.subr.mxu0 0.0
    %644 = vmatpush1.msra.mxu0 0.0
    %645 = vmatprep.subr.mxu0 0.0
    %646 = vmatpush1.msra.mxu0 0.0
    %647 = vmatprep.subr.mxu0 0.0
    %648 = vmatpush1.msra.mxu0 0.0
    %649 = vmatprep.subr.mxu0 0.0
    %650 = vmatpush1.msra.mxu0 0.0
    %651 = vmatprep.subr.mxu0 0.0
    %652 = vmatpush1.msra.mxu0 0.0
    %653 = vmatprep.subr.mxu0 0.0
    %654 = vmatpush1.msra.mxu0 0.0
    %655 = vmatprep.subr.mxu0 0.0
    %656 = vmatpush1.msra.mxu0 0.0
    %657 = vmatprep.subr.mxu0 0.0
    %658 = vmatpush1.msra.mxu0 0.0
    %659 = vmatprep.subr.mxu0 0.0
    %660 = vmatpush1.msra.mxu0 0.0
    %661 = vmatprep.subr.mxu0 0.0
    %662 = vmatpush1.msra.mxu0 0.0
    %663 = vmatprep.subr.mxu0 0.0
    %664 = vmatpush1.msra.mxu0 0.0
    %665 = vmatprep.subr.mxu0 0.0
    %666 = vmatpush1.msra.mxu0 0.0
    %667 = vmatprep.subr.mxu0 0.0
    %668 = vmatpush1.msra.mxu0 0.0
    %669 = vmatprep.subr.mxu0 0.0
    %670 = vmatpush1.msra.mxu0 0.0
    %671 = vmatprep.subr.mxu0 0.0
    %672 = vmatpush1.msra.mxu0 0.0
    %673 = vmatprep.subr.mxu0 0.0
    %674 = vmatpush1.msra.mxu0 0.0
    %675 = vmatprep.subr.mxu0 0.0
    %676 = vmatpush1.msra.mxu0 0.0
    %677 = vmatprep.subr.mxu0 0.0
    %678 = vmatpush1.msra.mxu0 0.0
    %679 = vmatprep.subr.mxu0 0.0
    %680 = vmatpush1.msra.mxu0 0.0
    %681 = vmatprep.subr.mxu0 0.0
    %682 = vmatpush1.msra.mxu0 0.0
    %683 = vmatprep.subr.mxu0 0.0
    %684 = vmatpush1.msra.mxu0 0.0
    %685 = vmatprep.subr.mxu0 0.0
    %686 = vmatpush1.msra.mxu0 0.0
    %687 = vmatprep.subr.mxu0 0.0
    %688 = vmatpush1.msra.mxu0 0.0
    %689 = vmatprep.subr.mxu0 0.0
    %690 = vmatpush1.msra.mxu0 0.0
    %691 = vmatprep.subr.mxu0 0.0
    %692 = vmatpush1.msra.mxu0 0.0
    %693 = vmatprep.subr.mxu0 0.0
    %694 = vmatpush1.msra.mxu0 0.0
    %695 = vmatprep.subr.mxu0 0.0
    %696 = vmatpush1.msra.mxu0 0.0
    %697 = vmatprep.subr.mxu0 0.0
    %698 = vmatpush1.msra.mxu0 0.0
    %699 = vmatprep.subr.mxu0 0.0
    %700 = vmatpush1.msra.mxu0 0.0
    %701 = vmatprep.subr.mxu0 0.0
    %702 = vmatpush1.msra.mxu0 0.0
    %703 = vmatprep.subr.mxu0 0.0
    %704 = vmatpush1.msra.mxu0 0.0
    %705 = vmatprep.mubr.f32.mxu0 0.0
    %706 = vmatmul.mubr.f32.gmra.mrb[0].mxu0 %v626
    %v707 = vpop.f32.mrb[0].mxu0
    %v708 = vadd.f32 %v601, %v707
    %v709 = vpop.f32.mrb[0].mxu0
    %v710 = vadd.f32 %v603, %v709
    %711 = vmatprep.mubr.f32.mxu0 0.0
    %712 = vmatmul.mubr.f32.gmra.mrb[0].mxu0 %v629
    %v713 = vpop.f32.mrb[0].mxu0
    %v714 = vadd.f32 %v607, %v713
    %v715 = vpop.f32.mrb[0].mxu0
    %v716 = vadd.f32 %v609, %v715
    %717 = vmatprep.mubr.f32.mxu0 0.0
    %718 = vmatmul.mubr.f32.gmra.mrb[0].mxu0 %v632
    %v719 = vpop.f32.mrb[0].mxu0
    %v720 = vadd.f32 %v613, %v719
    %v721 = vpop.f32.mrb[0].mxu0
    %v722 = vadd.f32 %v615, %v721
    %723 = vmatprep.mubr.f32.mxu0 0.0
    %724 = vmatmul.mubr.f32.gmra.mrb[0].mxu0 %v635
    %v725 = vpop.f32.mrb[0].mxu0
    %v726 = vadd.f32 %v619, %v725
    %v727 = vpop.f32.mrb[0].mxu0
    %v728 = vadd.f32 %v621, %v727
    %729 = vdwg.mxu0
    %s730 = scalar_lea.vmem %s5, 32
    %v731 = vld [vmem:[%s730] sm:$0xff]
    %v732 = vld [vmem:[%s730 + $0x8] sm:$0xff]
    %v733 = vld [vmem:[%s730 + $0x10] sm:$0xff]
    %v734 = vld [vmem:[%s730 + $0x18] sm:$0xff]
    %736 = vset.pattern.permute.xlu0 0
    %737 = vperm.xlu0 %736, %v731
    %v738 = vpop.permute.xlu0 %737
    %741 = vset.pattern.permute.xlu0 0
    %742 = vperm.xlu0 %741, %v732
    %v743 = vpop.permute.xlu0 %742
    %746 = vset.pattern.permute.xlu0 0
    %747 = vperm.xlu0 %746, %v733
    %v748 = vpop.permute.xlu0 %747
    %751 = vset.pattern.permute.xlu0 0
    %752 = vperm.xlu0 %751, %v734
    %v753 = vpop.permute.xlu0 %752
    %v755 = vadd.f32 %v708, %v738
    %v756 = vadd.f32 %v710, %v738
    %v757 = vadd.f32 %v714, %v743
    %v758 = vadd.f32 %v716, %v743
    %v759 = vadd.f32 %v720, %v748
    %v760 = vadd.f32 %v722, %v748
    %v761 = vadd.f32 %v726, %v753
    %v762 = vadd.f32 %v728, %v753
    %v763 = vmax.f32 %v755, 0.0
    %v764 = vmax.f32 %v756, 0.0
    %v765 = vmax.f32 %v757, 0.0
    %v766 = vmax.f32 %v758, 0.0
    %v767 = vmax.f32 %v759, 0.0
    %v768 = vmax.f32 %v760, 0.0
    %v769 = vmax.f32 %v761, 0.0
    %v770 = vmax.f32 %v762, 0.0
    %s771 = scalar_lea.vmem %s6, 32
    %v772 = vld [vmem:[%s771] sm:$0xff]
    %v773 = vld [vmem:[%s771 + $0x8] sm:$0xff]
    %v774 = vld [vmem:[%s771 + $0x10] sm:$0xff]
    %v775 = vld [vmem:[%s771 + $0x18] sm:$0xff]
    %777 = vset.pattern.permute.xlu0 0
    %778 = vperm.xlu0 %777, %v772
    %v779 = vpop.permute.xlu0 %778
    %782 = vset.pattern.permute.xlu0 0
    %783 = vperm.xlu0 %782, %v773
    %v784 = vpop.permute.xlu0 %783
    %787 = vset.pattern.permute.xlu0 0
    %788 = vperm.xlu0 %787, %v774
    %v789 = vpop.permute.xlu0 %788
    %792 = vset.pattern.permute.xlu0 0
    %793 = vperm.xlu0 %792, %v775
    %v794 = vpop.permute.xlu0 %793
    %v796 = vadd.f32 %v708, %v779
    %v797 = vadd.f32 %v710, %v779
    %v798 = vadd.f32 %v714, %v784
    %v799 = vadd.f32 %v716, %v784
    %v800 = vadd.f32 %v720, %v789
    %v801 = vadd.f32 %v722, %v789
    %v802 = vadd.f32 %v726, %v794
    %v803 = vadd.f32 %v728, %v794
    %v804 = vmax.f32 %v796, 0.0
    %v805 = vmax.f32 %v797, 0.0
    %v806 = vmax.f32 %v798, 0.0
    %v807 = vmax.f32 %v799, 0.0
    %v808 = vmax.f32 %v800, 0.0
    %v809 = vmax.f32 %v801, 0.0
    %v810 = vmax.f32 %v802, 0.0
    %v811 = vmax.f32 %v803, 0.0
    %v812 = vsub.f32 %v804, %v763
    %v813 = vsub.f32 %v805, %v764
    %v814 = vsub.f32 %v806, %v765
    %v815 = vsub.f32 %v807, %v766
    %v816 = vsub.f32 %v808, %v767
    %v817 = vsub.f32 %v809, %v768
    %v818 = vsub.f32 %v810, %v769
    %v819 = vsub.f32 %v811, %v770
    %v820 = vmul.f32 %v812, %v396
    %v821 = vmul.f32 %v813, %v396
    %v822 = vmul.f32 %v814, %v396
    %v823 = vmul.f32 %v815, %v396
    %v824 = vmul.f32 %v816, %v396
    %v825 = vmul.f32 %v817, %v396
    %v826 = vmul.f32 %v818, %v396
    %v827 = vmul.f32 %v819, %v396
    %v828 = vadd.f32 %v763, %v820
    %v829 = vadd.f32 %v764, %v821
    %v830 = vadd.f32 %v765, %v822
    %v831 = vadd.f32 %v766, %v823
    %v832 = vadd.f32 %v767, %v824
    %v833 = vadd.f32 %v768, %v825
    %v834 = vadd.f32 %v769, %v826
    %v835 = vadd.f32 %v770, %v827
    %836 = vmatprep.subr.mxu0 %v829
    %837 = vmatpush1.msra.mxu0 %v828
    %838 = vmatprep.subr.mxu0 %v831
    %839 = vmatpush1.msra.mxu0 %v830
    %840 = vmatprep.subr.mxu0 %v833
    %841 = vmatpush1.msra.mxu0 %v832
    %842 = vmatprep.subr.mxu0 %v835
    %843 = vmatpush1.msra.mxu0 %v834
    %844 = vmatprep.subr.mxu0 0.0
    %845 = vmatpush1.msra.mxu0 0.0
    %846 = vmatprep.subr.mxu0 0.0
    %847 = vmatpush1.msra.mxu0 0.0
    %848 = vmatprep.subr.mxu0 0.0
    %849 = vmatpush1.msra.mxu0 0.0
    %850 = vmatprep.subr.mxu0 0.0
    %851 = vmatpush1.msra.mxu0 0.0
    %852 = vmatprep.subr.mxu0 0.0
    %853 = vmatpush1.msra.mxu0 0.0
    %854 = vmatprep.subr.mxu0 0.0
    %855 = vmatpush1.msra.mxu0 0.0
    %856 = vmatprep.subr.mxu0 0.0
    %857 = vmatpush1.msra.mxu0 0.0
    %858 = vmatprep.subr.mxu0 0.0
    %859 = vmatpush1.msra.mxu0 0.0
    %860 = vmatprep.subr.mxu0 0.0
    %861 = vmatpush1.msra.mxu0 0.0
    %862 = vmatprep.subr.mxu0 0.0
    %863 = vmatpush1.msra.mxu0 0.0
    %864 = vmatprep.subr.mxu0 0.0
    %865 = vmatpush1.msra.mxu0 0.0
    %866 = vmatprep.subr.mxu0 0.0
    %867 = vmatpush1.msra.mxu0 0.0
    %868 = vmatprep.subr.mxu0 0.0
    %869 = vmatpush1.msra.mxu0 0.0
    %870 = vmatprep.subr.mxu0 0.0
    %871 = vmatpush1.msra.mxu0 0.0
    %872 = vmatprep.subr.mxu0 0.0
    %873 = vmatpush1.msra.mxu0 0.0
    %874 = vmatprep.subr.mxu0 0.0
    %875 = vmatpush1.msra.mxu0 0.0
    %876 = vmatprep.subr.mxu0 0.0
    %877 = vmatpush1.msra.mxu0 0.0
    %878 = vmatprep.subr.mxu0 0.0
    %879 = vmatpush1.msra.mxu0 0.0
    %880 = vmatprep.subr.mxu0 0.0
    %881 = vmatpush1.msra.mxu0 0.0
    %882 = vmatprep.subr.mxu0 0.0
    %883 = vmatpush1.msra.mxu0 0.0
    %884 = vmatprep.subr.mxu0 0.0
    %885 = vmatpush1.msra.mxu0 0.0
    %886 = vmatprep.subr.mxu0 0.0
    %887 = vmatpush1.msra.mxu0 0.0
    %888 = vmatprep.subr.mxu0 0.0
    %889 = vmatpush1.msra.mxu0 0.0
    %890 = vmatprep.subr.mxu0 0.0
    %891 = vmatpush1.msra.mxu0 0.0
    %892 = vmatprep.subr.mxu0 0.0
    %893 = vmatpush1.msra.mxu0 0.0
    %894 = vmatprep.subr.mxu0 0.0
    %895 = vmatpush1.msra.mxu0 0.0
    %896 = vmatprep.subr.mxu0 0.0
    %897 = vmatpush1.msra.mxu0 0.0
    %898 = vmatprep.subr.mxu0 0.0
    %899 = vmatpush1.msra.mxu0 0.0
    %900 = vmatprep.mubr.f32.mxu0 0.0
    %901 = vmatmul.mubr.f32.gmra.mrb[0].mxu0 %v420
    %v902 = vpop.f32.mrb[0].mxu0
    %v903 = vadd.f32 %v416, %v902
    %v904 = vpop.f32.mrb[0].mxu0
    %v905 = vadd.f32 %v416, %v904
    %906 = vdwg.mxu0
    %v909 = vcombine.low %v903, %v905
    %s911 = scalar_lea.vmem [#allocation8], 8
    %912 = vst [vmem:[%s911] sm:$0xff] %v909
    // Predicated region
    $region54: #{tpu_custom_call.1} parent=1 // pred_check
      _
    $region55: #{tpu_custom_call.1} parent=1 // pred_check_branch
      %914 = sbr.rel (0) target = $region57
    $region56: #{tpu_custom_call.1} parent=1 // pred_region
      %s916 = ssub.s32 256, 256
      %917 = vsyncadd [#allocation4], %s916
      %s918 = sshll.u32 [#allocation8], 4
      %s919 = int_to_ptr.vmem [resolvable:$true] %s918
      %924 = dma.vmem_to_hbm [thread:$0]  %s919, 256, %s11, [#allocation4], 128, 128, 8
    $region57: #{tpu_custom_call.1} parent=1 // pred_fallthru
      _
    // Predicated region
    $region58: #{tpu_custom_call.1} parent=1 // pred_check
      _
    $region59: #{tpu_custom_call.1} parent=1 // pred_check_branch
      %926 = sbr.rel (0) target = $region61
    $region60: #{tpu_custom_call.1} parent=1 // pred_region
      %927 = dma.done [#allocation4], 256
    $region61: #{tpu_custom_call.1} parent=1 // pred_fallthru
      _
    %928 = vsyncpa [#allocation4], 1
    %929 = vsyncpa [#allocation5], 1
    %930 = vsyncpa [#allocation7], 1

</llo_original>
